<compile_context>
chip_gen: v7x
topology: tpu7x:2x2x1
jax: 0.10.0
libtpu: 0.0.40
codegen_flags: <defaults>
</compile_context>

<pallas_src>
import numpy as np

import jax
import jax.numpy as jnp
from jax import lax
from jax.experimental import pallas as pl
from jax.experimental.pallas import tpu as pltpu


# ---------------------------------------------------------------------------
# Kernel 1: level-1 AvgPool2d(3, 1, 1) on one row slab (with 8-row halos).

def _pool3_slab_kernel(x_ref, prev_ref, next_ref, o_ref):
    i = pl.program_id(0)
    n = pl.num_programs(0)
    x = x_ref[...]                              # (slab, W)
    s, w = x.shape

    # Halo rows, zeroed at the true image boundary (zero padding).
    prev_row = prev_ref[7:8, :] * (i > 0).astype(jnp.float32)      # row above
    next_row = next_ref[0:1, :] * (i < n - 1).astype(jnp.float32)  # row below

    # Vertical 3-tap sum (boundary rows come from the halos).
    ridx = lax.broadcasted_iota(jnp.int32, x.shape, 0)
    up = pltpu.roll(x, shift=1, axis=0)         # up[r] = x[r-1]; row 0 wraps
    dn = pltpu.roll(x, shift=s - 1, axis=0)     # dn[r] = x[r+1]; row s-1 wraps
    up = jnp.where(ridx == 0, prev_row, up)
    dn = jnp.where(ridx == s - 1, next_row, dn)
    v = x + up + dn

    # Horizontal 3-tap sum with zero padding (full W is resident in the block).
    cidx = lax.broadcasted_iota(jnp.int32, x.shape, 1)
    lf = pltpu.roll(v, shift=1, axis=1)
    rt = pltpu.roll(v, shift=w - 1, axis=1)
    lf = jnp.where(cidx == 0, 0.0, lf)
    rt = jnp.where(cidx == w - 1, 0.0, rt)

    o_ref[...] = (v + lf + rt) * (1.0 / 9.0)


# ---------------------------------------------------------------------------
# Kernel 2: levels 2-4 as folded (pool . resize . pool) matmuls on the MXU.

def _pyramid_tail_kernel(t1_ref, a2_ref, b2_ref, a3_ref, b3_ref, a4_ref,
                         b4_ref, t2_ref, t3_ref, t4_ref):
    hp = lax.Precision.HIGHEST

    def sandwich(a, m, b):
        tmp = jnp.dot(a, m, precision=hp, preferred_element_type=jnp.float32)
        return jnp.dot(tmp, b, precision=hp, preferred_element_type=jnp.float32)

    t2 = sandwich(a2_ref[...], t1_ref[...], b2_ref[...])
    t2_ref[...] = t2
    t3 = sandwich(a3_ref[...], t2, b3_ref[...])
    t3_ref[...] = t3
    t4_ref[...] = sandwich(a4_ref[...], t3, b4_ref[...])


# ---------------------------------------------------------------------------
# Host-side constant operators (computed in float64, shipped as f32 inputs).

def _pool_matrix(n):
    """n x n tridiagonal matrix: 3-tap zero-padded average along one axis."""
    idx = np.arange(n)
    return (np.abs(idx[:, None] - idx[None, :]) <= 1).astype(np.float64) / 3.0


def _half_matrix(n):
    """(n//2) x n pairing matrix: 2 -> 1 averaging (exact 1/2-scale resize)."""
    m = np.zeros((n // 2, n), dtype=np.float64)
    r = np.arange(n // 2)
    m[r, 2 * r] = 0.5
    m[r, 2 * r + 1] = 0.5
    return m


def _folded_matrices(h, w):
    """Left/right operators so that t_{k+1} = A_k @ t_k @ B_k exactly matches
    pool3 -> resize(1/2) -> pool3 (with the extra pool3 on the t4 path)."""
    ph, pw = _pool_matrix(h), _pool_matrix(w)
    ph2, pw2 = _pool_matrix(h // 2), _pool_matrix(w // 2)
    ph4, pw4 = _pool_matrix(h // 4), _pool_matrix(w // 4)
    ph8, pw8 = _pool_matrix(h // 8), _pool_matrix(w // 8)
    sh, sw = _half_matrix(h), _half_matrix(w)             # (h/2,h), (w/2,w)
    sh2, sw2 = _half_matrix(h // 2), _half_matrix(w // 2)
    sh4, sw4 = _half_matrix(h // 4), _half_matrix(w // 4)

    a2 = ph2 @ sh @ ph                      # (h/2, h)
    b2 = pw @ sw.T @ pw2                    # (w, w/2)
    a3 = ph4 @ sh2 @ ph2                    # (h/4, h/2)
    b3 = pw2 @ sw2.T @ pw4                  # (w/2, w/4)
    a4 = ph8 @ sh4 @ ph4 @ ph4              # (h/8, h/4)   (double pool on t4 path)
    b4 = pw4 @ pw4 @ sw4.T @ pw8            # (w/4, w/8)
    return tuple(jnp.asarray(m, dtype=jnp.float32)
                 for m in (a2, b2, a3, b3, a4, b4))


def _pick_slab(h):
    """Largest multiple-of-8 divisor of h that is <= min(h//4, 128)."""
    hi = (min(h // 4, 128) // 8) * 8
    for cand in range(hi, 7, -8):
        if h % cand == 0:
            return cand
    return h


def _vmem_limit(nbytes):
    # actual buffer sum + headroom, clamped to v7x's 64 MiB physical VMEM.
    return int(min(max(nbytes + (4 << 20), 16 << 20), 64 << 20))


# ---------------------------------------------------------------------------
# Forward pass.

def convert_forward(x):
    """Mirrors Convert.forward: returns [t1, t2, t3, t4]."""
    H, W = x.shape
    assert H % 8 == 0 and W % 8 == 0, "pyramid needs three exact halvings"
    x = x.astype(jnp.float32)

    # ---- Call 1: level-1 pool over row slabs (pipelined, "parallel"). ----
    slab = _pick_slab(H)
    nslab = H // slab
    sb = slab // 8            # slab size measured in 8-row halo blocks
    nb = H // 8               # number of 8-row halo blocks in the image

    call1_bytes = 4 * W * (2 * slab + 4 * 8 + 2 * slab + 4 * slab)
    t1 = pl.pallas_call(
        _pool3_slab_kernel,
        out_shape=jax.ShapeDtypeStruct((H, W), jnp.float32),
        grid=(nslab,),
        in_specs=[
            pl.BlockSpec((slab, W), lambda i: (i, 0)),
            # 8-row halo block just above / below the slab; clamped block
            # indices stay in range, the kernel zero-masks at image borders.
            pl.BlockSpec((8, W), lambda i: (jnp.maximum(i * sb - 1, 0), 0)),
            pl.BlockSpec((8, W), lambda i: (jnp.minimum((i + 1) * sb, nb - 1), 0)),
        ],
        out_specs=pl.BlockSpec((slab, W), lambda i: (i, 0)),
        compiler_params=pltpu.CompilerParams(
            dimension_semantics=("parallel",),
            vmem_limit_bytes=_vmem_limit(call1_bytes)),
    )(x, x, x)

    # ---- Call 2: levels 2-4 as six tiny HIGHEST-precision matmuls. ----
    mats = _folded_matrices(H, W)
    shapes = ((H // 2, W // 2), (H // 4, W // 4), (H // 8, W // 8))
    mat_bytes = sum(int(np.prod(m.shape)) for m in mats) * 4
    out_bytes = sum(h * w for h, w in shapes) * 4
    call2_bytes = 3 * H * W * 4 + 2 * (mat_bytes + out_bytes)

    t2, t3, t4 = pl.pallas_call(
        _pyramid_tail_kernel,
        out_shape=tuple(jax.ShapeDtypeStruct(s, jnp.float32) for s in shapes),
        in_specs=[pl.BlockSpec((H, W), lambda: (0, 0))]
                 + [pl.BlockSpec(m.shape, lambda: (0, 0)) for m in mats],
        out_specs=tuple(pl.BlockSpec(s, lambda: (0, 0)) for s in shapes),
        compiler_params=pltpu.CompilerParams(
            vmem_limit_bytes=_vmem_limit(call2_bytes)),
    )(t1, *mats)

    return [t1, t2, t3, t4]


# ---------------------------------------------------------------------------
# Pure-JAX reference (sequential pools, exactly mirroring the torch module).

def _avgpool3_ref(x):
    xp = jnp.pad(x, 1)
    H, W = x.shape
    acc = jnp.zeros_like(x)
    for dr in range(3):
        for dc in range(3):
            acc = acc + xp[dr:dr + H, dc:dc + W]
    return acc / 9.0


def _downsample_ref(x):
    H, W = x.shape
    return x.reshape(H // 2, 2, W // 2, 2).mean(axis=(1, 3))


def _convert_forward_ref(x):
    t1 = _avgpool3_ref(x)
    t2 = _avgpool3_ref(_downsample_ref(_avgpool3_ref(t1)))
    t3 = _avgpool3_ref(_downsample_ref(_avgpool3_ref(t2)))
    t4 = _avgpool3_ref(_downsample_ref(_avgpool3_ref(_avgpool3_ref(t3))))
    return [t1, t2, t3, t4]


if __name__ == "__main__":
    key = jax.random.PRNGKey(0)
    H, W = 64, 64
    x = jax.random.normal(key, (H, W), dtype=jnp.float32)

    outs = jax.block_until_ready(convert_forward(x))

    refs = _convert_forward_ref(x)
    expected_shapes = [(64, 64), (32, 32), (16, 16), (8, 8)]
    for o, r, s in zip(outs, refs, expected_shapes):
        assert o.shape == s, (o.shape, s)
        # f32 (vs the f64 torch reference); HIGHEST-precision matmuls and
        # f64-folded operator matrices keep the kernel within ~1e-6 of the
        # sequential f32 reference.
        assert jnp.allclose(o, r, rtol=1e-4, atol=1e-4), float(
            jnp.max(jnp.abs(o - r)))

    print("KERNEL_OK")
</pallas_src>

<mosaic_0001>
module attributes {stable_mosaic.version = 11 : i64} {
  func.func @_pool3_slab_kernel(%arg0: i32, %arg1: memref<16x64xf32, #tpu.memory_space<vmem>>, %arg2: memref<8x64xf32, #tpu.memory_space<vmem>>, %arg3: memref<8x64xf32, #tpu.memory_space<vmem>>, %arg4: memref<16x64xf32, #tpu.memory_space<vmem>>) attributes {dimension_semantics = [#tpu.dimension_semantics<parallel>], iteration_bounds = array<i64: 4>, scalar_prefetch = 0 : i64, scratch_operands = 0 : i64, tpu.core_type = #tpu.core_type<tc>, window_params = [{transform_indices = @transform_0, window_bounds = array<i64: 16, 64>}, {transform_indices = @transform_1, window_bounds = array<i64: 8, 64>}, {transform_indices = @transform_2, window_bounds = array<i64: 8, 64>}, {transform_indices = @transform_3, window_bounds = array<i64: 16, 64>}]} {
    %c0 = arith.constant 0 : index
    %c0_0 = arith.constant 0 : index
    %0 = vector.load %arg1[%c0, %c0_0] : memref<16x64xf32, #tpu.memory_space<vmem>>, vector<16x64xf32>
    %c7 = arith.constant 7 : index
    %c0_1 = arith.constant 0 : index
    %1 = vector.load %arg2[%c7, %c0_1] : memref<8x64xf32, #tpu.memory_space<vmem>>, vector<1x64xf32>
    %c0_i32 = arith.constant 0 : i32
    %2 = arith.cmpi sgt, %arg0, %c0_i32 : i32
    %3 = arith.extui %2 : i1 to i32
    %4 = arith.sitofp %3 : i32 to f32
    %5 = vector.broadcast %4 : f32 to vector<1x64xf32>
    %6 = arith.mulf %1, %5 : vector<1x64xf32>
    %c0_2 = arith.constant 0 : index
    %c0_3 = arith.constant 0 : index
    %7 = vector.load %arg3[%c0_2, %c0_3] : memref<8x64xf32, #tpu.memory_space<vmem>>, vector<1x64xf32>
    %c3_i32 = arith.constant 3 : i32
    %8 = arith.cmpi slt, %arg0, %c3_i32 : i32
    %9 = arith.extui %8 : i1 to i32
    %10 = arith.sitofp %9 : i32 to f32
    %11 = vector.broadcast %10 : f32 to vector<1x64xf32>
    %12 = arith.mulf %7, %11 : vector<1x64xf32>
    %13 = tpu.iota {dimensions = array<i32: 0>} : vector<16x64xi32>
    %c1_i32 = arith.constant 1 : i32
    %14 = tpu.dynamic_rotate %0 by %c1_i32 dim 0 : vector<16x64xf32>, i32 -> vector<16x64xf32>
    %c15_i32 = arith.constant 15 : i32
    %15 = tpu.dynamic_rotate %0 by %c15_i32 dim 0 : vector<16x64xf32>, i32 -> vector<16x64xf32>
    %c0_i32_4 = arith.constant 0 : i32
    %16 = vector.broadcast %c0_i32_4 : i32 to vector<16x64xi32>
    %17 = arith.cmpi eq, %13, %16 : vector<16x64xi32>
    %18 = vector.shape_cast %6 : vector<1x64xf32> to vector<1x64xf32>
    %19 = vector.broadcast %18 : vector<1x64xf32> to vector<16x64xf32>
    %20 = arith.select %17, %19, %14 : vector<16x64xi1>, vector<16x64xf32>
    %c15_i32_5 = arith.constant 15 : i32
    %21 = vector.broadcast %c15_i32_5 : i32 to vector<16x64xi32>
    %22 = arith.cmpi eq, %13, %21 : vector<16x64xi32>
    %23 = vector.shape_cast %12 : vector<1x64xf32> to vector<1x64xf32>
    %24 = vector.broadcast %23 : vector<1x64xf32> to vector<16x64xf32>
    %25 = arith.select %22, %24, %15 : vector<16x64xi1>, vector<16x64xf32>
    %26 = arith.addf %0, %20 : vector<16x64xf32>
    %27 = arith.addf %26, %25 : vector<16x64xf32>
    %28 = tpu.iota {dimensions = array<i32: 1>} : vector<16x64xi32>
    %c1_i32_6 = arith.constant 1 : i32
    %29 = tpu.dynamic_rotate %27 by %c1_i32_6 dim 1 : vector<16x64xf32>, i32 -> vector<16x64xf32>
    %c63_i32 = arith.constant 63 : i32
    %30 = tpu.dynamic_rotate %27 by %c63_i32 dim 1 : vector<16x64xf32>, i32 -> vector<16x64xf32>
    %c0_i32_7 = arith.constant 0 : i32
    %31 = vector.broadcast %c0_i32_7 : i32 to vector<16x64xi32>
    %32 = arith.cmpi eq, %28, %31 : vector<16x64xi32>
    %cst = arith.constant 0.000000e+00 : f32
    %33 = vector.broadcast %cst : f32 to vector<16x64xf32>
    %34 = arith.select %32, %33, %29 : vector<16x64xi1>, vector<16x64xf32>
    %c63_i32_8 = arith.constant 63 : i32
    %35 = vector.broadcast %c63_i32_8 : i32 to vector<16x64xi32>
    %36 = arith.cmpi eq, %28, %35 : vector<16x64xi32>
    %cst_9 = arith.constant 0.000000e+00 : f32
    %37 = vector.broadcast %cst_9 : f32 to vector<16x64xf32>
    %38 = arith.select %36, %37, %30 : vector<16x64xi1>, vector<16x64xf32>
    %39 = arith.addf %27, %34 : vector<16x64xf32>
    %40 = arith.addf %39, %38 : vector<16x64xf32>
    %cst_10 = arith.constant 0.111111112 : f32
    %41 = vector.broadcast %cst_10 : f32 to vector<16x64xf32>
    %42 = arith.mulf %40, %41 : vector<16x64xf32>
    %c0_11 = arith.constant 0 : index
    %c0_12 = arith.constant 0 : index
    %43 = vector.load %arg4[%c0_11, %c0_12] : memref<16x64xf32, #tpu.memory_space<vmem>>, vector<16x64xf32>
    tpu.vector_store %arg4[%c0_11, %c0_12], %42 {strides = array<i32>} : memref<16x64xf32, #tpu.memory_space<vmem>>, vector<16x64xf32>,
    return
  }
  func.func @transform_0(%arg0: i32) -> (i32, i32) {
    %c0_i32 = arith.constant 0 : i32
    %c0_i32_0 = arith.constant 0 : i32
    return %arg0, %c0_i32 : i32, i32
  }
  func.func @transform_1(%arg0: i32) -> (i32, i32) {
    %c2_i32 = arith.constant 2 : i32
    %0 = arith.muli %arg0, %c2_i32 : i32
    %c1_i32 = arith.constant 1 : i32
    %1 = arith.subi %0, %c1_i32 : i32
    %c0_i32 = arith.constant 0 : i32
    %2 = arith.maxsi %1, %c0_i32 : i32
    %c0_i32_0 = arith.constant 0 : i32
    %c0_i32_1 = arith.constant 0 : i32
    return %2, %c0_i32_0 : i32, i32
  }
  func.func @transform_2(%arg0: i32) -> (i32, i32) {
    %c1_i32 = arith.constant 1 : i32
    %0 = arith.addi %arg0, %c1_i32 : i32
    %c2_i32 = arith.constant 2 : i32
    %1 = arith.muli %0, %c2_i32 : i32
    %c7_i32 = arith.constant 7 : i32
    %2 = arith.minsi %1, %c7_i32 : i32
    %c0_i32 = arith.constant 0 : i32
    %c0_i32_0 = arith.constant 0 : i32
    return %2, %c0_i32 : i32, i32
  }
  func.func @transform_3(%arg0: i32) -> (i32, i32) {
    %c0_i32 = arith.constant 0 : i32
    %c0_i32_0 = arith.constant 0 : i32
    return %arg0, %c0_i32 : i32, i32
  }
}

</mosaic_0001>

<llo_original>
// kernel: tpu_custom_call.1
$region0: #{tpu_custom_call.1}
  #allocation0 [shape = 'u32[]', space=smem, size = 0x4, offset = 0x4, fixed_abs, tag = 'smem constant byte address 0x4 - core index']
  #allocation1 [shape = 'u32[144,128]{1,0:T(1,128)}', space=vmem, size = 0x12000, scoped, tag = 'internal scratch']
  %s0 = inlined_call_operand.hbm [shape: f32[64,64], index: 0, kind: input, shape index: {}]
  %s1 = inlined_call_operand.hbm [shape: f32[64,64], index: 1, kind: input, shape index: {}]
  %s2 = inlined_call_operand.hbm [shape: f32[64,64], index: 2, kind: input, shape index: {}]
  %s3 = inlined_call_operand.hbm [shape: f32[64,64], index: 3, kind: output, shape index: {}]
  %s4 = sld [smem:[#allocation0]]
  $region57: #{tpu_custom_call.1} parent=0
    _
  %s6 = ssub.s32 1, %s4
  %s7 = scalar_select 0, %s6, %s4
  $region1: #{tpu_custom_call.1} parent=0
    #allocation2 [shape = 'u8[16384]{0}', space=vmem, size = 0x4000, scoped, tag = 'input window, operand 0']
    #allocation3 [shape = 's32[2]{0}', space=sflag, size = 0x8, scoped, tag = 'scoped memory for tpu_custom_call.1']
    #allocation4 [shape = 's32[2]{0}', space=sflag, size = 0x8, scoped, tag = 'scoped memory for tpu_custom_call.1']
    #allocation5 [shape = 'u8[8192]{0}', space=vmem, size = 0x2000, scoped, tag = 'input window, operand 1']
    #allocation6 [shape = 's32[2]{0}', space=sflag, size = 0x8, scoped, tag = 'scoped memory for tpu_custom_call.1']
    #allocation7 [shape = 'u8[8192]{0}', space=vmem, size = 0x2000, scoped, tag = 'input window, operand 2']
    #allocation8 [shape = 'u8[16384]{0}', space=vmem, size = 0x4000, scoped, tag = 'output window, operand 0']
    %8 = vsyncpa [#allocation3], 0
    %s9 = scalar_lea.sflag [#allocation3], 1
    %10 = vsyncpa %s9, 0
    %11 = vsyncpa [#allocation6], 0
    %s12 = scalar_lea.sflag [#allocation6], 1
    %13 = vsyncpa %s12, 0
    %14 = vsyncpa [#allocation4], 0
    %s15 = scalar_lea.sflag [#allocation4], 1
    %16 = vsyncpa %s15, 0
    loop: start=0, step=1, limit=6
    $region2: #{tpu_custom_call.1} parent=1 // loop_pre_header
      _
    $region3: #{tpu_custom_call.1} parent=1 // loop_header
      %s18 = sphi 0, %s22
      %p19 = scmp.ge.s32.totalorder %s18, 6
      %s28 = sphi 0, %s30
      %s31 = sphi 0, %s28
      %s32 = sphi 0, %s31
      %s48 = sphi 0, %s32
      %s62 = sphi 0, %s64
      %s65 = sphi 0, %s62
      %s66 = sphi 0, %s65
      %s82 = sphi 0, %s66
      %s96 = sphi 0, %s98
      %s99 = sphi 0, %s96
      %s100 = sphi 0, %s99
      %s116 = sphi 0, %s100
      %s122 = sphi 0, %s124
      %s125 = sphi 0, %s122
      %s126 = sphi 0, %s125
      %s142 = sphi 0, %s126
    $region4: #{tpu_custom_call.1} parent=1 // loop_header_branch
      %21 = sbr.rel (%p19) target = $region8
    $region5: #{tpu_custom_call.1} parent=1 // loop_body
      %s23 = ssub.s32 %s18, 1
      %s24 = ssub.s32 %s18, 2
      %s25 = sadd.s32 %s18, 1
      %s26 = ssub.s32 %s18, %s25
      %p27 = scmp.eq.s32.totalorder %s26, 0
      %s29 = sadd.s32 %s28, 1
      %s30 = scalar_select %p27, %s28, %s29
      %p33 = pneg %p27
      %p34 = scmp.eq.s32.totalorder %s18, 3
      %p35 = por %p33, %p34
      %p36 = scmp.ne.s32.totalorder %s28, %s31
      %p37 = scmp.eq.s32.totalorder %s18, 0
      %p38 = por %p36, %p37
      %p39 = scmp.ne.s32.totalorder %s28, %s31
      %p40 = scmp.eq.s32.totalorder %s23, 3
      %p41 = por %p39, %p40
      %p42 = scmp.ne.s32.totalorder %s31, %s32
      %p43 = scmp.eq.s32.totalorder %s23, 0
      %p44 = por %p42, %p43
      %p45 = scmp.ne.s32.totalorder %s31, %s32
      %p46 = scmp.eq.s32.totalorder %s24, 3
      %p47 = por %p45, %p46
      %p49 = scmp.ne.s32.totalorder %s32, %s48
      %p50 = scmp.eq.s32.totalorder %s24, 0
      %p51 = por %p49, %p50
      %s52 = smul.u32 %s18, 2
      %s53 = ssub.s32 %s52, 1
      %p54 = scmp.gt.s32.totalorder %s53, 0
      %s55 = scalar_select %p54, %s53, 0
      %s56 = smul.u32 %s25, 2
      %s57 = ssub.s32 %s56, 1
      %p58 = scmp.gt.s32.totalorder %s57, 0
      %s59 = scalar_select %p58, %s57, 0
      %s60 = ssub.s32 %s55, %s59
      %p61 = scmp.eq.s32.totalorder %s60, 0
      %s63 = sadd.s32 %s62, 1
      %s64 = scalar_select %p61, %s62, %s63
      %p67 = pneg %p61
      %p68 = scmp.eq.s32.totalorder %s18, 3
      %p69 = por %p67, %p68
      %p70 = scmp.ne.s32.totalorder %s62, %s65
      %p71 = scmp.eq.s32.totalorder %s18, 0
      %p72 = por %p70, %p71
      %p73 = scmp.ne.s32.totalorder %s62, %s65
      %p74 = scmp.eq.s32.totalorder %s23, 3
      %p75 = por %p73, %p74
      %p76 = scmp.ne.s32.totalorder %s65, %s66
      %p77 = scmp.eq.s32.totalorder %s23, 0
      %p78 = por %p76, %p77
      %p79 = scmp.ne.s32.totalorder %s65, %s66
      %p80 = scmp.eq.s32.totalorder %s24, 3
      %p81 = por %p79, %p80
      %p83 = scmp.ne.s32.totalorder %s66, %s82
      %p84 = scmp.eq.s32.totalorder %s24, 0
      %p85 = por %p83, %p84
      %s86 = sadd.s32 %s18, 1
      %s87 = smul.u32 %s86, 2
      %p88 = scmp.lt.s32.totalorder %s87, 7
      %s89 = scalar_select %p88, %s87, 7
      %s90 = sadd.s32 %s25, 1
      %s91 = smul.u32 %s90, 2
      %p92 = scmp.lt.s32.totalorder %s91, 7
      %s93 = scalar_select %p92, %s91, 7
      %s94 = ssub.s32 %s89, %s93
      %p95 = scmp.eq.s32.totalorder %s94, 0
      %s97 = sadd.s32 %s96, 1
      %s98 = scalar_select %p95, %s96, %s97
      %p101 = pneg %p95
      %p102 = scmp.eq.s32.totalorder %s18, 3
      %p103 = por %p101, %p102
      %p104 = scmp.ne.s32.totalorder %s96, %s99
      %p105 = scmp.eq.s32.totalorder %s18, 0
      %p106 = por %p104, %p105
      %p107 = scmp.ne.s32.totalorder %s96, %s99
      %p108 = scmp.eq.s32.totalorder %s23, 3
      %p109 = por %p107, %p108
      %p110 = scmp.ne.s32.totalorder %s99, %s100
      %p111 = scmp.eq.s32.totalorder %s23, 0
      %p112 = por %p110, %p111
      %p113 = scmp.ne.s32.totalorder %s99, %s100
      %p114 = scmp.eq.s32.totalorder %s24, 3
      %p115 = por %p113, %p114
      %p117 = scmp.ne.s32.totalorder %s100, %s116
      %p118 = scmp.eq.s32.totalorder %s24, 0
      %p119 = por %p117, %p118
      %s120 = ssub.s32 %s18, %s25
      %p121 = scmp.eq.s32.totalorder %s120, 0
      %s123 = sadd.s32 %s122, 1
      %s124 = scalar_select %p121, %s122, %s123
      %p127 = pneg %p121
      %p128 = scmp.eq.s32.totalorder %s18, 3
      %p129 = por %p127, %p128
      %p130 = scmp.ne.s32.totalorder %s122, %s125
      %p131 = scmp.eq.s32.totalorder %s18, 0
      %p132 = por %p130, %p131
      %p133 = scmp.ne.s32.totalorder %s122, %s125
      %p134 = scmp.eq.s32.totalorder %s23, 3
      %p135 = por %p133, %p134
      %p136 = scmp.ne.s32.totalorder %s125, %s126
      %p137 = scmp.eq.s32.totalorder %s23, 0
      %p138 = por %p136, %p137
      %p139 = scmp.ne.s32.totalorder %s125, %s126
      %p140 = scmp.eq.s32.totalorder %s24, 3
      %p141 = por %p139, %p140
      %p143 = scmp.ne.s32.totalorder %s126, %s142
      %p144 = scmp.eq.s32.totalorder %s24, 0
      %p145 = por %p143, %p144
      %p146 = scmp.le.s32.totalorder 1, %s18
      %p147 = scmp.lt.s32.totalorder %s18, 5
      %p148 = pnand %p146, %p147
      %p149 = pneg %p148
      // Predicated region
      $region9: #{tpu_custom_call.1} parent=5 // pred_check
        _
      $region10: #{tpu_custom_call.1} parent=5 // pred_check_branch
        %151 = sbr.rel (%p148) target = $region12
      $region11: #{tpu_custom_call.1} parent=5 // pred_region
        %s152 = ssub.s32 %s18, 1
      $region12: #{tpu_custom_call.1} parent=5 // pred_fallthru
        _
      %p153 = scmp.lt.s32.totalorder %s18, 4
      // Predicated region
      $region13: #{tpu_custom_call.1} parent=5 // pred_check
        %p154 = pneg %p153
      $region14: #{tpu_custom_call.1} parent=5 // pred_check_branch
        %156 = sbr.rel (%p154) target = $region16
      $region15: #{tpu_custom_call.1} parent=5 // pred_region
        // Predicated region
        $region17: #{tpu_custom_call.1} parent=15 // pred_check
          %p157 = pneg %p38
        $region18: #{tpu_custom_call.1} parent=15 // pred_check_branch
          %159 = sbr.rel (%p157) target = $region20
        $region19: #{tpu_custom_call.1} parent=15 // pred_region
          %s160 = sand.u32 %s28, 1
          %s161 = scalar_lea.sflag [#allocation3], %s160
          %s162 = sand.u32 %s28, 1
          %s163 = smul.addr %s162, 16
          %s164 = scalar_lea.vmem [#allocation2], %s163
          %s165 = smul.u32 2, %s18
          %s167 = ssub.s32 256, 256
          %168 = vsyncadd %s161, %s167
          %s169 = smul.addr %s165, 128
          %s170 = scalar_lea.hbm %s0, %s169
          %s171 = sshll.u32 %s164, 4
          %s172 = int_to_ptr.vmem [resolvable:$true] %s171
          %177 = dma.hbm_to_vmem [thread:$0]  %s170, 256, %s172, %s161, 128, 128, 8
        $region20: #{tpu_custom_call.1} parent=15 // pred_fallthru
          _
        // Predicated region
        $region21: #{tpu_custom_call.1} parent=15 // pred_check
          %p178 = pneg %p72
        $region22: #{tpu_custom_call.1} parent=15 // pred_check_branch
          %180 = sbr.rel (%p178) target = $region24
        $region23: #{tpu_custom_call.1} parent=15 // pred_region
          %s181 = sand.u32 %s18, 1
          %s182 = scalar_lea.sflag [#allocation6], %s181
          %s183 = sand.u32 %s62, 1
          %s184 = smul.addr %s183, 8
          %s185 = scalar_lea.vmem [#allocation5], %s184
          %s186 = smul.u32 %s18, 2
          %s187 = ssub.s32 %s186, 1
          %p188 = scmp.gt.s32.totalorder %s187, 0
          %s189 = scalar_select %p188, %s187, 0
          %s191 = ssub.s32 128, 128
          %192 = vsyncadd %s182, %s191
          %s193 = smul.addr %s189, 128
          %s194 = scalar_lea.hbm %s1, %s193
          %s196 = sshll.u32 %s185, 4
          %s197 = int_to_ptr.vmem [resolvable:$true] %s196
          %199 = dma.hbm_to_vmem [thread:$0]  %s194, 128, %s197, %s182
        $region24: #{tpu_custom_call.1} parent=15 // pred_fallthru
          _
        // Predicated region
        $region25: #{tpu_custom_call.1} parent=15 // pred_check
          %p200 = pneg %p106
        $region26: #{tpu_custom_call.1} parent=15 // pred_check_branch
          %202 = sbr.rel (%p200) target = $region28
        $region27: #{tpu_custom_call.1} parent=15 // pred_region
          %s203 = sand.u32 %s18, 1
          %s204 = scalar_lea.sflag [#allocation6], %s203
          %s205 = sand.u32 %s96, 1
          %s206 = smul.addr %s205, 8
          %s207 = scalar_lea.vmem [#allocation7], %s206
          %s208 = sadd.s32 %s18, 1
          %s209 = smul.u32 %s208, 2
          %p210 = scmp.lt.s32.totalorder %s209, 7
          %s211 = scalar_select %p210, %s209, 7
          %s213 = ssub.s32 128, 128
          %214 = vsyncadd %s204, %s213
          %s215 = smul.addr %s211, 128
          %s216 = scalar_lea.hbm %s2, %s215
          %s218 = sshll.u32 %s207, 4
          %s219 = int_to_ptr.vmem [resolvable:$true] %s218
          %221 = dma.hbm_to_vmem [thread:$0]  %s216, 128, %s219, %s204
        $region28: #{tpu_custom_call.1} parent=15 // pred_fallthru
          _
      $region16: #{tpu_custom_call.1} parent=5 // pred_fallthru
        _
      %p222 = scmp.le.s32.totalorder 1, %s18
      %p223 = scmp.lt.s32.totalorder %s18, 5
      %p224 = pnand %p222, %p223
      %p225 = pneg %p224
      // Predicated region
      $region29: #{tpu_custom_call.1} parent=5 // pred_check
        _
      $region30: #{tpu_custom_call.1} parent=5 // pred_check_branch
        %227 = sbr.rel (%p224) target = $region32
      $region31: #{tpu_custom_call.1} parent=5 // pred_region
        %s228 = ssub.s32 %s18, 1
        %s229 = sand.u32 %s31, 1
        %s230 = scalar_lea.sflag [#allocation3], %s229
        %s231 = sand.u32 %s31, 1
        %s232 = smul.addr %s231, 16
        %s233 = scalar_lea.vmem [#allocation2], %s232
        // Predicated region
        $region33: #{tpu_custom_call.1} parent=31 // pred_check
          %p234 = pneg %p44
        $region34: #{tpu_custom_call.1} parent=31 // pred_check_branch
          %236 = sbr.rel (%p234) target = $region36
        $region35: #{tpu_custom_call.1} parent=31 // pred_region
          %237 = dma.done %s230, 256
        $region36: #{tpu_custom_call.1} parent=31 // pred_fallthru
          _
        %s238 = sand.u32 %s23, 1
        %s239 = scalar_lea.sflag [#allocation6], %s238
        %s240 = sand.u32 %s65, 1
        %s241 = smul.addr %s240, 8
        %s242 = scalar_lea.vmem [#allocation5], %s241
        // Predicated region
        $region37: #{tpu_custom_call.1} parent=31 // pred_check
          %p243 = pneg %p78
        $region38: #{tpu_custom_call.1} parent=31 // pred_check_branch
          %245 = sbr.rel (%p243) target = $region40
        $region39: #{tpu_custom_call.1} parent=31 // pred_region
          %246 = dma.done %s239, 128
        $region40: #{tpu_custom_call.1} parent=31 // pred_fallthru
          _
        %s247 = sand.u32 %s23, 1
        %s248 = scalar_lea.sflag [#allocation6], %s247
        %s249 = sand.u32 %s99, 1
        %s250 = smul.addr %s249, 8
        %s251 = scalar_lea.vmem [#allocation7], %s250
        // Predicated region
        $region41: #{tpu_custom_call.1} parent=31 // pred_check
          %p252 = pneg %p112
        $region42: #{tpu_custom_call.1} parent=31 // pred_check_branch
          %254 = sbr.rel (%p252) target = $region44
        $region43: #{tpu_custom_call.1} parent=31 // pred_region
          %255 = dma.done %s248, 128
        $region44: #{tpu_custom_call.1} parent=31 // pred_fallthru
          _
        %s256 = sand.u32 %s31, 1
        %s257 = scalar_lea.sflag [#allocation3], %s256
        %s258 = sand.u32 %s31, 1
        %s259 = smul.addr %s258, 16
        %s260 = scalar_lea.vmem [#allocation2], %s259
        %p261 = pneg %p44
        %p262 = pneg %p41
        %s263 = sand.u32 %s23, 1
        %s264 = scalar_lea.sflag [#allocation6], %s263
        %s265 = sand.u32 %s65, 1
        %s266 = smul.addr %s265, 8
        %s267 = scalar_lea.vmem [#allocation5], %s266
        %p268 = pneg %p78
        %p269 = pneg %p75
        %s270 = sand.u32 %s23, 1
        %s271 = scalar_lea.sflag [#allocation6], %s270
        %s272 = sand.u32 %s99, 1
        %s273 = smul.addr %s272, 8
        %s274 = scalar_lea.vmem [#allocation7], %s273
        %p275 = pneg %p112
        %p276 = pneg %p109
        %p277 = pneg %p138
        %p278 = pneg %p135
        %s279 = sand.u32 %s125, 1
        %s280 = scalar_lea.sflag [#allocation4], %s279
        %s281 = sand.u32 %s125, 1
        %s282 = smul.addr %s281, 16
        %s283 = scalar_lea.vmem [#allocation8], %s282
        %s284 = smul.u32 2, %s23
        %s285 = smul.u32 %s23, 2
        %s286 = ssub.s32 %s285, 1
        %p287 = scmp.gt.s32.totalorder %s286, 0
        %s288 = scalar_select %p287, %s286, 0
        %s289 = sadd.s32 %s23, 1
        %s290 = smul.u32 %s289, 2
        %p291 = scmp.lt.s32.totalorder %s290, 7
        %s292 = scalar_select %p291, %s290, 7
        %s293 = smul.u32 2, %s23
        %v294 = vld [vmem:[%s233] sm:$0xff]
        %v295 = vld [vmem:[%s233 + $0x8] sm:$0xff]
        %v296 = vld [vmem:[%s242 + $0x7] sm:$0x1]
        %p297 = scmp.gt.s32.totalorder %s23, 0
        %s298 = scalar_select %p297, 1, 0
        %s299 = scvt.s32.f32 %s298
        %v300 = vstv %s299
        %v301 = vmul.f32 %v296, %v300
        %v302 = vld [vmem:[%s251] sm:$0x1]
        %p303 = scmp.lt.s32.totalorder %s23, 3
        %s304 = scalar_select %p303, 1, 0
        %s305 = scvt.s32.f32 %s304
        %v306 = vstv %s305
        %v307 = vmul.f32 %v302, %v306
        %v308 = vlaneseq
        %v309 = vshrl.u32 %v308, 7
        %v310 = vadd.s32 %v309, 8
        %v311 = vrot.slane %v294, 7
        %v312 = vrot.slane %v295, 7
        %vm313 = vcmp.lt.s32.totalorder %v309, 1
        %v314 = vsel %vm313, %v311, %v312
        %v315 = vsel %vm313, %v312, %v311
        %v316 = vrot.slane %v294, 1
        %v317 = vrot.slane %v295, 1
        %vm318 = vcmp.lt.s32.totalorder %v309, 7
        %v319 = vsel %vm318, %v316, %v317
        %v320 = vsel %vm318, %v317, %v316
        %vm321 = vcmp.eq.s32.totalorder %v309, 0
        %vm322 = vcmp.eq.s32.totalorder %v310, 0
        %v323 = vlaneseq
        %v324 = vshrl.u32 %v323, 7
        %v325 = vsub.s32 0, %v324
        %v326 = vrot.slane %v301, %v325
        %v327 = vsel %vm321, %v326, %v315
        %v328 = vsel %vm322, %v326, %v314
        %vm329 = vcmp.eq.s32.totalorder %v309, 15
        %vm330 = vcmp.eq.s32.totalorder %v310, 15
        %v331 = vlaneseq
        %v332 = vshrl.u32 %v331, 7
        %v333 = vsub.s32 0, %v332
        %v334 = vrot.slane %v307, %v333
        %v335 = vsel %vm329, %v334, %v319
        %v336 = vsel %vm330, %v334, %v320
        %v337 = vadd.f32 %v294, %v327
        %v338 = vadd.f32 %v295, %v328
        %v339 = vadd.f32 %v337, %v335
        %v340 = vadd.f32 %v338, %v336
        %v341 = vlaneseq
        %v342 = vand.u32 %v341, 127
        %vm343 = vcmask 1048064
        %344 = vrot.lane.b32.xlu0 %v339, 64
        %v345 = vpop.permute.xlu0 %344
        %v346 = vsel %vm343, %v345, %v339
        %347 = vrot.lane.b32.xlu0 %v340, 64
        %v348 = vpop.permute.xlu0 %347
        %v349 = vsel %vm343, %v348, %v340
        %350 = vrot.lane.b32.xlu0 %v346, 64
        %v351 = vpop.permute.xlu0 %350
        %352 = vrot.lane.b32.xlu0 %v349, 64
        %v353 = vpop.permute.xlu0 %352
        %v354 = vsel %vm343, %v351, %v339
        %v355 = vsel %vm343, %v353, %v340
        %vm356 = vcmp.eq.s32.totalorder %v342, 0
        %359 = vrot.lane.b32.xlu0 %v354, 65
        %v360 = vpop.permute.xlu0 %359
        %361 = vrot.lane.b32.xlu0 %v355, 65
        %v362 = vpop.permute.xlu0 %361
        %v365 = vsel %vm356, 0.0, %v360
        %v366 = vsel %vm356, 0.0, %v362
        %vm367 = vcmp.eq.s32.totalorder %v342, 63
        %368 = vrot.lane.b32.xlu0 %v354, 127
        %v369 = vpop.permute.xlu0 %368
        %370 = vrot.lane.b32.xlu0 %v355, 127
        %v371 = vpop.permute.xlu0 %370
        %v374 = vsel %vm367, 0.0, %v369
        %v375 = vsel %vm367, 0.0, %v371
        %v376 = vadd.f32 %v339, %v365
        %v377 = vadd.f32 %v340, %v366
        %v378 = vadd.f32 %v376, %v374
        %v379 = vadd.f32 %v377, %v375
        %v380 = vmul.f32 %v378, 0.11111111
        %v381 = vmul.f32 %v379, 0.11111111
        %vm382 = vcmask 523264
        %383 = vst.msk [vmem:[%s283] sm:$0xff] %vm382, %v380
        %384 = vst.msk [vmem:[%s283 + $0x8] sm:$0xff] %vm382, %v381
        %s385 = sand.u32 %s125, 1
        %s386 = scalar_lea.sflag [#allocation4], %s385
        %s387 = sand.u32 %s125, 1
        %s388 = smul.addr %s387, 16
        %s389 = scalar_lea.vmem [#allocation8], %s388
        // Predicated region
        $region45: #{tpu_custom_call.1} parent=31 // pred_check
          %p390 = pneg %p135
        $region46: #{tpu_custom_call.1} parent=31 // pred_check_branch
          %392 = sbr.rel (%p390) target = $region48
        $region47: #{tpu_custom_call.1} parent=31 // pred_region
          %s393 = smul.u32 2, %s23
          %s395 = ssub.s32 256, 256
          %396 = vsyncadd %s386, %s395
          %s397 = smul.addr %s393, 128
          %s398 = scalar_lea.hbm %s3, %s397
          %s399 = sshll.u32 %s389, 4
          %s400 = int_to_ptr.vmem [resolvable:$true] %s399
          %405 = dma.vmem_to_hbm [thread:$0]  %s400, 256, %s398, %s386, 128, 128, 8
        $region48: #{tpu_custom_call.1} parent=31 // pred_fallthru
          _
      $region32: #{tpu_custom_call.1} parent=5 // pred_fallthru
        _
      %p406 = scmp.le.s32.totalorder 2, %s18
      // Predicated region
      $region49: #{tpu_custom_call.1} parent=5 // pred_check
        %p407 = pneg %p406
      $region50: #{tpu_custom_call.1} parent=5 // pred_check_branch
        %409 = sbr.rel (%p407) target = $region52
      $region51: #{tpu_custom_call.1} parent=5 // pred_region
        %s410 = ssub.s32 %s18, 2
        // Predicated region
        $region53: #{tpu_custom_call.1} parent=51 // pred_check
          %p411 = pneg %p141
        $region54: #{tpu_custom_call.1} parent=51 // pred_check_branch
          %413 = sbr.rel (%p411) target = $region56
        $region55: #{tpu_custom_call.1} parent=51 // pred_region
          %s414 = sand.u32 %s126, 1
          %s415 = scalar_lea.sflag [#allocation4], %s414
          %s416 = sand.u32 %s126, 1
          %s417 = smul.addr %s416, 16
          %s418 = scalar_lea.vmem [#allocation8], %s417
          %419 = dma.done %s415, 256
        $region56: #{tpu_custom_call.1} parent=51 // pred_fallthru
          _
      $region52: #{tpu_custom_call.1} parent=5 // pred_fallthru
        _
    $region6: #{tpu_custom_call.1} parent=1 // loop_footer
      %s22 = sadd.s32 1, %s18
    $region7: #{tpu_custom_call.1} parent=1 // loop_footer_branch
      %17 = sbr.rel target = $region3
    $region8: #{tpu_custom_call.1} parent=1 // loop_exit
      _
    %420 = vsyncpa [#allocation3], 1
    %s421 = scalar_lea.sflag [#allocation3], 1
    %422 = vsyncpa %s421, 1
    %423 = vsyncpa [#allocation6], 1
    %s424 = scalar_lea.sflag [#allocation6], 1
    %425 = vsyncpa %s424, 1
    %426 = vsyncpa [#allocation4], 1
    %s427 = scalar_lea.sflag [#allocation4], 1
    %428 = vsyncpa %s427, 1

</llo_original>
